<compile_context>
chip_gen: v5e
topology: v5e:2x2
jax: 0.10.0
libtpu: 0.0.40
codegen_flags: <defaults>
</compile_context>

<pallas_src>
import jax
import jax.numpy as jnp
from jax import lax
from jax.experimental import pallas as pl
from jax.experimental.pallas import tpu as pltpu


def _round_up(x, m):
    return ((x + m - 1) // m) * m


def _choose_batch_tile(batch, seq_len, target_rows=512):
    """Largest divisor TB of `batch` with TB*seq_len <= target_rows whose row
    count is sublane-aligned (multiple of 8) or covers the whole batch."""
    if batch * seq_len <= target_rows:
        return batch
    best = None
    for tb in range(1, batch + 1):
        if batch % tb:
            continue
        rows = tb * seq_len
        if rows % 8 != 0 and tb != batch:
            continue
        if rows <= target_rows:
            best = tb
        else:
            break
    return batch if best is None else best


def _encoder_embedding_kernel(ex_ref, cat_ref, tbl_ref, pos_ref, out_ref):
    """One (token-tile, vocab-tile) grid step.

    ex_ref  : (TM, 1) int32   exercise ids for this token tile
    cat_ref : (TM, 1) int32   category ids, pre-offset by n_exercises
    tbl_ref : (TV, D) float32 one vocab tile of [exercise_table; category_table]
    pos_ref : (TM, D) float32 position embeddings pre-tiled to the token tile
    out_ref : (TM, D) float32 output block, resident across the vocab grid axis
    """
    kv = pl.program_id(1)
    tm = ex_ref.shape[0]
    tv = tbl_ref.shape[0]

    # Initialise the resident accumulator with the position embedding.
    @pl.when(kv == 0)
    def _init():
        out_ref[...] = pos_ref[...]

    # Global vocab index of every lane of this vocab tile.
    col = lax.broadcasted_iota(jnp.int32, (tm, tv), 1) + kv * tv

    # "Two-hot" LHS: 1 at the exercise column and 1 at the (offset) category
    # column of each token row.  Exercise / category id ranges are disjoint, so
    # one MXU pass produces e + c for every id falling inside this vocab tile.
    # Kept in f32: 0/1 times the f32 table with f32 accumulation is an exact
    # gather (nn.Embedding semantics).
    two_hot = ((col == ex_ref[...]).astype(jnp.float32) +
               (col == cat_ref[...]).astype(jnp.float32))

    out_ref[...] += jnp.dot(two_hot, tbl_ref[...],
                            preferred_element_type=jnp.float32)


def encoder_embedding(exercises, categories, ex_table, cat_table, pos_table):
    """Pallas forward of EncoderEmbedding.

    exercises, categories: int32 [B, S]
    ex_table:  f32 [n_exercises, D]
    cat_table: f32 [n_categories, D]
    pos_table: f32 [S, D]
    returns:   f32 [B, S, D] == pos[None] + cat_table[categories] + ex_table[exercises]
    """
    B, S = exercises.shape
    n_ex, D = ex_table.shape
    n_cat, d2 = cat_table.shape
    assert d2 == D and pos_table.shape == (S, D)

    # --- tiling -------------------------------------------------------------
    TB = _choose_batch_tile(B, S)            # batch rows per grid step
    TM = TB * S                              # token rows per grid step (MXU M dim)
    num_mb = B // TB

    V = n_ex + n_cat
    TV = min(512, _round_up(V, 128))         # vocab rows per grid step
    Vp = _round_up(V, TV)
    num_kv = Vp // TV

    # --- host-side prep (cheap, outside the kernel) ---------------------------
    # Combined table: exercise rows first, category rows offset by n_ex,
    # zero-padded up to Vp (padded rows are never selected by any id).
    table = jnp.concatenate([ex_table, cat_table], axis=0)
    if Vp != V:
        table = jnp.pad(table, ((0, Vp - V), (0, 0)))

    ex_ids = exercises.astype(jnp.int32).reshape(B * S, 1)
    cat_ids = (categories.astype(jnp.int32) + n_ex).reshape(B * S, 1)
    # Each M tile covers whole batch rows, so its position pattern is simply
    # pos_table repeated TB times.
    pos_tiled = jnp.tile(pos_table, (TB, 1))                 # (TM, D)

    # --- explicit VMEM budget (don't rely on the scoped default) --------------
    working_set = (2 * TV * D * 4            # table tile, double-buffered
                   + 2 * 2 * TM * 128 * 4    # id tiles (lane-padded), double-buffered
                   + 2 * TM * D * 4          # pos tile
                   + 2 * TM * D * 4          # output tile
                   + 2 * TM * TV * 4)        # two-hot intermediates + headroom
    vmem_limit = int(min(48 * 2 ** 20, max(32 * 2 ** 20, 2 * working_set)))

    flat = pl.pallas_call(
        _encoder_embedding_kernel,
        out_shape=jax.ShapeDtypeStruct((B * S, D), jnp.float32),
        grid_spec=pltpu.PrefetchScalarGridSpec(
            num_scalar_prefetch=0,
            # Batch-tile axis is parallel (shards across v7x's 2 TensorCores);
            # the vocab axis is the innermost reduction axis.
            grid=(num_mb, num_kv),
            in_specs=[
                pl.BlockSpec((TM, 1), lambda mb, kv: (mb, 0)),    # exercise ids
                pl.BlockSpec((TM, 1), lambda mb, kv: (mb, 0)),    # category ids (offset)
                pl.BlockSpec((TV, D), lambda mb, kv: (kv, 0)),    # combined-table tile
                pl.BlockSpec((TM, D), lambda mb, kv: (0, 0)),     # tiled positions
            ],
            out_specs=pl.BlockSpec((TM, D), lambda mb, kv: (mb, 0)),
        ),
        compiler_params=pltpu.CompilerParams(
            dimension_semantics=("parallel", "arbitrary"),
            vmem_limit_bytes=vmem_limit),
    )(ex_ids, cat_ids, table, pos_tiled)

    # Row-major (B*S, D) -> (B, S, D) is a free metadata reshape.
    return flat.reshape(B, S, D)


def _reference(exercises, categories, ex_table, cat_table, pos_table):
    e = ex_table[exercises]                  # (B, S, D)
    c = cat_table[categories]                # (B, S, D)
    p = pos_table[None, :, :]                # (1, S, D)
    return p + c + e


def _run_case(key, batch, seq_len, n_dims, n_exercises, n_categories):
    k_ex, k_cat, k_et, k_ct, k_pt = jax.random.split(key, 5)

    exercises = jax.random.randint(k_ex, (batch, seq_len), 0, n_exercises,
                                   dtype=jnp.int32)
    categories = jax.random.randint(k_cat, (batch, seq_len), 0, n_categories,
                                    dtype=jnp.int32)
    ex_table = jax.random.normal(k_et, (n_exercises, n_dims), dtype=jnp.float32)
    cat_table = jax.random.normal(k_ct, (n_categories, n_dims), dtype=jnp.float32)
    pos_table = jax.random.normal(k_pt, (seq_len, n_dims), dtype=jnp.float32)

    out = encoder_embedding(exercises, categories, ex_table, cat_table, pos_table)
    out = jax.block_until_ready(out)

    ref = _reference(exercises, categories, ex_table, cat_table, pos_table)
    assert out.shape == (batch, seq_len, n_dims)
    assert jnp.allclose(out, ref, atol=1e-5, rtol=1e-5)


if __name__ == "__main__":
    root = jax.random.PRNGKey(0)
    k0, k1 = jax.random.split(root, 2)

    # Primary, module-consistent small shapes.
    _run_case(k0, batch=2, seq_len=8, n_dims=32, n_exercises=64, n_categories=16)

    # Secondary shapes exercising multiple batch tiles and multiple vocab tiles
    # (table padding + accumulation across the "arbitrary" vocab axis).
    _run_case(k1, batch=16, seq_len=64, n_dims=32, n_exercises=520, n_categories=24)

    print("KERNEL_OK")
</pallas_src>

<mosaic_0001>
module attributes {stable_mosaic.version = 11 : i64} {
  func.func @_encoder_embedding_kernel(%arg0: i32, %arg1: i32, %arg2: memref<16x1xi32, #tpu.memory_space<vmem>>, %arg3: memref<16x1xi32, #tpu.memory_space<vmem>>, %arg4: memref<128x32xf32, #tpu.memory_space<vmem>>, %arg5: memref<16x32xf32, #tpu.memory_space<vmem>>, %arg6: memref<16x32xf32, #tpu.memory_space<vmem>>) attributes {dimension_semantics = [#tpu.dimension_semantics<parallel>, #tpu.dimension_semantics<arbitrary>], iteration_bounds = array<i64: 1, 1>, scalar_prefetch = 0 : i64, scratch_operands = 0 : i64, tpu.core_type = #tpu.core_type<tc>, window_params = [{transform_indices = @transform_0, window_bounds = array<i64: 16, 1>}, {transform_indices = @transform_1, window_bounds = array<i64: 16, 1>}, {transform_indices = @transform_2, window_bounds = array<i64: 128, 32>}, {pipeline_mode = #tpu.pipeline_mode<synchronous>, transform_indices = @transform_3, window_bounds = array<i64: 16, 32>}, {transform_indices = @transform_4, window_bounds = array<i64: 16, 32>}]} {
    %c0_i32 = arith.constant 0 : i32
    %0 = arith.cmpi eq, %arg1, %c0_i32 : i32
    %1 = arith.extui %0 : i1 to i32
    %c0_i32_0 = arith.constant 0 : i32
    %2 = arith.cmpi ne, %1, %c0_i32_0 : i32
    scf.if %2 {
      %c0_10 = arith.constant 0 : index
      %c0_11 = arith.constant 0 : index
      %23 = vector.load %arg5[%c0_10, %c0_11] : memref<16x32xf32, #tpu.memory_space<vmem>>, vector<16x32xf32>
      %c0_12 = arith.constant 0 : index
      %c0_13 = arith.constant 0 : index
      %24 = vector.load %arg6[%c0_12, %c0_13] : memref<16x32xf32, #tpu.memory_space<vmem>>, vector<16x32xf32>
      tpu.vector_store %arg6[%c0_12, %c0_13], %23 {strides = array<i32>} : memref<16x32xf32, #tpu.memory_space<vmem>>, vector<16x32xf32>,
    } else {
    }
    %3 = tpu.iota {dimensions = array<i32: 1>} : vector<16x128xi32>
    %c128_i32 = arith.constant 128 : i32
    %4 = arith.muli %arg1, %c128_i32 : i32
    %5 = vector.broadcast %4 : i32 to vector<16x128xi32>
    %6 = arith.addi %3, %5 : vector<16x128xi32>
    %c0 = arith.constant 0 : index
    %c0_1 = arith.constant 0 : index
    %7 = vector.load %arg2[%c0, %c0_1] : memref<16x1xi32, #tpu.memory_space<vmem>>, vector<16x1xi32>
    %8 = vector.broadcast %7 : vector<16x1xi32> to vector<16x128xi32>
    %9 = arith.cmpi eq, %6, %8 : vector<16x128xi32>
    %10 = arith.extui %9 : vector<16x128xi1> to vector<16x128xi32>
    %11 = arith.sitofp %10 : vector<16x128xi32> to vector<16x128xf32>
    %c0_2 = arith.constant 0 : index
    %c0_3 = arith.constant 0 : index
    %12 = vector.load %arg3[%c0_2, %c0_3] : memref<16x1xi32, #tpu.memory_space<vmem>>, vector<16x1xi32>
    %13 = vector.broadcast %12 : vector<16x1xi32> to vector<16x128xi32>
    %14 = arith.cmpi eq, %6, %13 : vector<16x128xi32>
    %15 = arith.extui %14 : vector<16x128xi1> to vector<16x128xi32>
    %16 = arith.sitofp %15 : vector<16x128xi32> to vector<16x128xf32>
    %17 = arith.addf %11, %16 : vector<16x128xf32>
    %c0_4 = arith.constant 0 : index
    %c0_5 = arith.constant 0 : index
    %18 = vector.load %arg6[%c0_4, %c0_5] : memref<16x32xf32, #tpu.memory_space<vmem>>, vector<16x32xf32>
    %c0_6 = arith.constant 0 : index
    %c0_7 = arith.constant 0 : index
    %19 = vector.load %arg4[%c0_6, %c0_7] : memref<128x32xf32, #tpu.memory_space<vmem>>, vector<128x32xf32>
    %cst = arith.constant dense<0.000000e+00> : vector<16x32xf32>
    %20 = tpu.matmul %17, %19, %cst {dimension_numbers = #tpu.dot_dimension_numbers<[1], [0], [0], [1], [0, 0, 1, 1], [], []>} : vector<16x128xf32>, vector<128x32xf32>, vector<16x32xf32> -> vector<16x32xf32>
    %21 = arith.addf %18, %20 : vector<16x32xf32>
    %c0_8 = arith.constant 0 : index
    %c0_9 = arith.constant 0 : index
    %22 = vector.load %arg6[%c0_8, %c0_9] : memref<16x32xf32, #tpu.memory_space<vmem>>, vector<16x32xf32>
    tpu.vector_store %arg6[%c0_8, %c0_9], %21 {strides = array<i32>} : memref<16x32xf32, #tpu.memory_space<vmem>>, vector<16x32xf32>,
    return
  }
  func.func @transform_0(%arg0: i32, %arg1: i32) -> (i32, i32) {
    %c0_i32 = arith.constant 0 : i32
    %c0_i32_0 = arith.constant 0 : i32
    return %arg0, %c0_i32 : i32, i32
  }
  func.func @transform_1(%arg0: i32, %arg1: i32) -> (i32, i32) {
    %c0_i32 = arith.constant 0 : i32
    %c0_i32_0 = arith.constant 0 : i32
    return %arg0, %c0_i32 : i32, i32
  }
  func.func @transform_2(%arg0: i32, %arg1: i32) -> (i32, i32) {
    %c0_i32 = arith.constant 0 : i32
    %c0_i32_0 = arith.constant 0 : i32
    return %arg1, %c0_i32 : i32, i32
  }
  func.func @transform_3(%arg0: i32, %arg1: i32) -> (i32, i32) {
    %c0_i32 = arith.constant 0 : i32
    %c0_i32_0 = arith.constant 0 : i32
    %c0_i32_1 = arith.constant 0 : i32
    return %c0_i32, %c0_i32_0 : i32, i32
  }
  func.func @transform_4(%arg0: i32, %arg1: i32) -> (i32, i32) {
    %c0_i32 = arith.constant 0 : i32
    %c0_i32_0 = arith.constant 0 : i32
    return %arg0, %c0_i32 : i32, i32
  }
}

</mosaic_0001>

<llo_original>
// kernel: tpu_custom_call.1
$region0: #{tpu_custom_call.1}
  #allocation0 [shape = 'u32[]', space=smem, size = 0x4, offset = 0x4, fixed_abs, tag = 'smem constant byte address 0x4 - core index']
  #allocation1 [shape = 'u32[72,128]{1,0:T(1,128)}', space=vmem, size = 0x9000, scoped, tag = 'internal scratch']
  %s0 = inlined_call_operand.vmem [shape: s32[16,1], index: 0, kind: input, shape index: {}]
  %s1 = inlined_call_operand.vmem [shape: s32[16,1], index: 1, kind: input, shape index: {}]
  %s2 = inlined_call_operand.vmem [shape: f32[128,32], index: 2, kind: input, shape index: {}]
  %s3 = inlined_call_operand.vmem [shape: f32[16,32], index: 3, kind: input, shape index: {}]
  %s4 = inlined_call_operand.hbm [shape: f32[16,32], index: 4, kind: output, shape index: {}]
  %s5 = sld [smem:[#allocation0]]
  $region30: #{tpu_custom_call.1} parent=0
    _
  %s7 = ssub.s32 1, %s5
  %s8 = scalar_select 0, %s7, %s5
  $region1: #{tpu_custom_call.1} parent=0
    #allocation2 [shape = 'u8[8192]{0}', space=vmem, size = 0x2000, scoped, tag = 'output window, operand 0, single buffered']
    #allocation3 [shape = 's32[1]{0}', space=sflag, size = 0x4, scoped, tag = 'scoped memory for tpu_custom_call.1']
    %9 = vsyncpa [#allocation3], 0
    // Predicated region
    $region2: #{tpu_custom_call.1} parent=1 // pred_check
      _
    $region3: #{tpu_custom_call.1} parent=1 // pred_check_branch
      %11 = sbr.rel (0) target = $region5
    $region4: #{tpu_custom_call.1} parent=1 // pred_region
      _
    $region5: #{tpu_custom_call.1} parent=1 // pred_fallthru
      _
    // Predicated region
    $region6: #{tpu_custom_call.1} parent=1 // pred_check
      _
    $region7: #{tpu_custom_call.1} parent=1 // pred_check_branch
      %13 = sbr.rel (0) target = $region9
    $region8: #{tpu_custom_call.1} parent=1 // pred_region
      _
    $region9: #{tpu_custom_call.1} parent=1 // pred_fallthru
      _
    // Predicated region
    $region10: #{tpu_custom_call.1} parent=1 // pred_check
      _
    $region11: #{tpu_custom_call.1} parent=1 // pred_check_branch
      %15 = sbr.rel (0) target = $region13
    $region12: #{tpu_custom_call.1} parent=1 // pred_region
      _
    $region13: #{tpu_custom_call.1} parent=1 // pred_fallthru
      _
    // Predicated region
    $region14: #{tpu_custom_call.1} parent=1 // pred_check
      _
    $region15: #{tpu_custom_call.1} parent=1 // pred_check_branch
      %17 = sbr.rel (0) target = $region17
    $region16: #{tpu_custom_call.1} parent=1 // pred_region
      _
    $region17: #{tpu_custom_call.1} parent=1 // pred_fallthru
      _
    %p18 = scmp.eq.s32.totalorder 0, 0
    // Predicated region
    $region18: #{tpu_custom_call.1} parent=1 // pred_check
      %p19 = pneg %p18
    $region19: #{tpu_custom_call.1} parent=1 // pred_check_branch
      %21 = sbr.rel (%p19) target = $region21
    $region20: #{tpu_custom_call.1} parent=1 // pred_region
      %v22 = vld [vmem:[%s3] sm:$0xff]
      %v23 = vld [vmem:[%s3 + $0x8] sm:$0xff]
      %vm24 = vcmask 261120
      %25 = vst.msk [vmem:[#allocation2] sm:$0xff] %vm24, %v22
      %26 = vst.msk [vmem:[#allocation2 + $0x8] sm:$0xff] %vm24, %v23
    $region21: #{tpu_custom_call.1} parent=1 // pred_fallthru
      _
    %v27 = vlaneseq
    %v28 = vand.u32 %v27, 127
    %s29 = smul.u32 0, 128
    %v30 = vstv %s29
    %v31 = vadd.s32 %v28, %v30
    %v32 = vld [vmem:[%s0] sm:$0xff]
    %v33 = vld [vmem:[%s0 + $0x8] sm:$0xff]
    %34 = vset.pattern.permute.xlu0 0
    %35 = vperm.xlu0 %34, %v32
    %v36 = vpop.permute.xlu0 %35
    %37 = vset.pattern.permute.xlu0 0
    %38 = vperm.xlu0 %37, %v33
    %v39 = vpop.permute.xlu0 %38
    %vm40 = vcmp.eq.s32.totalorder %v31, %v36
    %vm41 = vcmp.eq.s32.totalorder %v31, %v39
    %v42 = vsel %vm40, 1, 0
    %v43 = vsel %vm41, 1, 0
    %v44 = vcvt.s32.f32 %v42
    %v45 = vcvt.s32.f32 %v43
    %v46 = vld [vmem:[%s1] sm:$0xff]
    %v47 = vld [vmem:[%s1 + $0x8] sm:$0xff]
    %48 = vset.pattern.permute.xlu0 0
    %49 = vperm.xlu0 %48, %v46
    %v50 = vpop.permute.xlu0 %49
    %51 = vset.pattern.permute.xlu0 0
    %52 = vperm.xlu0 %51, %v47
    %v53 = vpop.permute.xlu0 %52
    %vm54 = vcmp.eq.s32.totalorder %v31, %v50
    %vm55 = vcmp.eq.s32.totalorder %v31, %v53
    %v56 = vsel %vm54, 1, 0
    %v57 = vsel %vm55, 1, 0
    %v58 = vcvt.s32.f32 %v56
    %v59 = vcvt.s32.f32 %v57
    %v60 = vadd.f32 %v44, %v58
    %v61 = vadd.f32 %v45, %v59
    %v62 = vld [vmem:[#allocation2] sm:$0xff]
    %v63 = vld [vmem:[#allocation2 + $0x8] sm:$0xff]
    %v64 = vld [vmem:[%s2] sm:$0xff]
    %v65 = vld [vmem:[%s2 + $0x8] sm:$0xff]
    %v66 = vld [vmem:[%s2 + $0x10] sm:$0xff]
    %v67 = vld [vmem:[%s2 + $0x18] sm:$0xff]
    %v68 = vld [vmem:[%s2 + $0x20] sm:$0xff]
    %v69 = vld [vmem:[%s2 + $0x28] sm:$0xff]
    %v70 = vld [vmem:[%s2 + $0x30] sm:$0xff]
    %v71 = vld [vmem:[%s2 + $0x38] sm:$0xff]
    %v72 = vld [vmem:[%s2 + $0x40] sm:$0xff]
    %v73 = vld [vmem:[%s2 + $0x48] sm:$0xff]
    %v74 = vld [vmem:[%s2 + $0x50] sm:$0xff]
    %v75 = vld [vmem:[%s2 + $0x58] sm:$0xff]
    %v76 = vld [vmem:[%s2 + $0x60] sm:$0xff]
    %v77 = vld [vmem:[%s2 + $0x68] sm:$0xff]
    %v78 = vld [vmem:[%s2 + $0x70] sm:$0xff]
    %v79 = vld [vmem:[%s2 + $0x78] sm:$0xff]
    %80 = vmatpush.msra.mxu0 %v79
    %81 = vmatpush.msra.mxu0 %v78
    %82 = vmatpush.msra.mxu0 %v77
    %83 = vmatpush.msra.mxu0 %v76
    %84 = vmatpush.msra.mxu0 %v75
    %85 = vmatpush.msra.mxu0 %v74
    %86 = vmatpush.msra.mxu0 %v73
    %87 = vmatpush.msra.mxu0 %v72
    %88 = vmatpush.msra.mxu0 %v71
    %89 = vmatpush.msra.mxu0 %v70
    %90 = vmatpush.msra.mxu0 %v69
    %91 = vmatpush.msra.mxu0 %v68
    %92 = vmatpush.msra.mxu0 %v67
    %93 = vmatpush.msra.mxu0 %v66
    %94 = vmatpush.msra.mxu0 %v65
    %95 = vmatpush.msra.mxu0 %v64
    %96 = vmatmul.f32.gmra.mxu0 %v60
    %v97 = vpop.f32.mrf.mxu0
    %v98 = vadd.f32 0.0, %v97
    %99 = vmatmul.f32.gmra.mxu0 %v61
    %v100 = vpop.f32.mrf.mxu0
    %v101 = vadd.f32 0.0, %v100
    %102 = vdwg.mxu0
    %v103 = vadd.f32 %v62, %v98
    %v104 = vadd.f32 %v63, %v101
    %vm105 = vcmask 261120
    %106 = vst.msk [vmem:[#allocation2] sm:$0xff] %vm105, %v103
    %107 = vst.msk [vmem:[#allocation2 + $0x8] sm:$0xff] %vm105, %v104
    // Predicated region
    $region22: #{tpu_custom_call.1} parent=1 // pred_check
      _
    $region23: #{tpu_custom_call.1} parent=1 // pred_check_branch
      %109 = sbr.rel (0) target = $region25
    $region24: #{tpu_custom_call.1} parent=1 // pred_region
      %111 = vsyncadd [#allocation3], 0
      %s112 = sshll.u32 [#allocation2], 4
      %s113 = int_to_ptr.vmem [resolvable:$true] %s112
      %s114 = sshll.u32 %s4, 4
      %s115 = int_to_ptr.hbm [resolvable:$true] %s114
      %120 = dma.vmem_to_hbm [thread:$0]  %s113, 256, %s115, [#allocation3], 128, 128, 8
    $region25: #{tpu_custom_call.1} parent=1 // pred_fallthru
      _
    // Predicated region
    $region26: #{tpu_custom_call.1} parent=1 // pred_check
      _
    $region27: #{tpu_custom_call.1} parent=1 // pred_check_branch
      %122 = sbr.rel (0) target = $region29
    $region28: #{tpu_custom_call.1} parent=1 // pred_region
      %124 = dma.done [#allocation3], 256
    $region29: #{tpu_custom_call.1} parent=1 // pred_fallthru
      _
    %125 = vsyncpa [#allocation3], 1

</llo_original>
